<compile_context>
chip_gen: v7x
topology: tpu7x:2x2x1
jax: 0.10.0
libtpu: 0.0.40
codegen_flags: <defaults>
</compile_context>

<pallas_src>
import functools
import math

import jax
import jax.numpy as jnp
from jax import lax
from jax.experimental import pallas as pl
from jax.experimental.pallas import tpu as pltpu

# geoopt float32 constants
_PROJ_EPS = 4e-3     # ball-projection epsilon for float32
_MIN_NORM = 1e-15    # norm clamp
_ATANH_EPS = 1e-7    # artanh input clamp (reference only; dead in-kernel)


# ------------------------- in-kernel hyperbolic math -------------------------
# Column layout: tensors are (features, batch); per-sample norms reduce axis 0.

def _col_norms(x):
    """Per-column L2 norm of x: (F, B) -> (raw sumsq, norm, inv_norm), each (1, B)."""
    sumsq_raw = jnp.sum(x * x, axis=0, keepdims=True)
    sumsq = jnp.maximum(sumsq_raw, _MIN_NORM * _MIN_NORM)
    return sumsq_raw, jnp.sqrt(sumsq), lax.rsqrt(sumsq)


def _artanh_on_ball(x):
    """artanh for x = sqrt(c)*||p|| with p already projected: x in [0, 1-4e-3],
    so the geoopt clamp to (-1+1e-7, 1-1e-7) can never fire and is omitted."""
    return 0.5 * (jnp.log1p(x) - jnp.log1p(-x))


def _project(x, norm, inv_norm, maxnorm):
    """Clip columns back inside the Poincare ball.  Returns (x, norm, inv_norm)."""
    outside = norm > maxnorm                                  # (1, B)
    x_p = jnp.where(outside, (inv_norm * maxnorm) * x, x)     # (F, B)
    norm_p = jnp.where(outside, maxnorm, norm)
    inv_p = jnp.where(outside, 1.0 / maxnorm, inv_norm)
    return x_p, norm_p, inv_p


def _expmap0(u, u_norm, u_inv, sqrt_c, inv_sqrt_c, maxnorm):
    """exp map at the origin (+ projection).  Norms of u are passed in (reused)."""
    t = jnp.tanh(sqrt_c * u_norm)                             # (1, B)   EUP
    gamma = (t * (inv_sqrt_c * u_inv)) * u                    # (F, B)
    g_norm = jnp.maximum(t * inv_sqrt_c, _MIN_NORM)           # analytic ||gamma||
    g_inv = pl.reciprocal(g_norm, approx=True)                # EUP, not VALU divide
    return _project(gamma, g_norm, g_inv, maxnorm)


def _mobius_matvec(w, x, x_norm, x_inv, sqrt_c, inv_sqrt_c, maxnorm):
    """Mobius matrix-vector multiply (+ projection) in column layout.

    w: (out, in); x: (in, B) already on the ball, with its norms passed in.
    """
    mx = jnp.dot(w, x, preferred_element_type=jnp.float32)    # (out, B)  MXU
    mx_sumsq, mx_norm, mx_inv = _col_norms(mx)
    t = jnp.tanh((mx_norm * x_inv) * _artanh_on_ball(sqrt_c * x_norm))   # (1, B)
    res = (t * (inv_sqrt_c * mx_inv)) * mx                               # (out, B)
    zero = mx_sumsq == 0.0                      # all-zero column (raw sumsq reused)
    res = jnp.where(zero, 0.0, res)
    r_norm = jnp.where(zero, _MIN_NORM,
                       jnp.maximum(t * inv_sqrt_c, _MIN_NORM))  # analytic ||res||
    r_inv = pl.reciprocal(r_norm, approx=True)
    return _project(res, r_norm, r_inv, maxnorm)


def _hyperbolic_linear(x, w, b, sqrt_c, inv_sqrt_c, maxnorm):
    """y = expmap0(mobius_matvec(W, expmap0(x))) + b   (column layout)."""
    _, x_norm, x_inv = _col_norms(x)
    xe, xe_norm, xe_inv = _expmap0(x, x_norm, x_inv, sqrt_c, inv_sqrt_c, maxnorm)
    m, m_norm, m_inv = _mobius_matvec(w, xe, xe_norm, xe_inv,
                                      sqrt_c, inv_sqrt_c, maxnorm)
    y, _, _ = _expmap0(m, m_norm, m_inv, sqrt_c, inv_sqrt_c, maxnorm)
    return y + b                                   # b: (out, 1), broadcasts over B


# --------------------------------- kernel ------------------------------------

def hyper_nn_kernel(x_ref, w1_ref, b1_ref, w2_ref, b2_ref, o_ref, *,
                    sqrt_c, inv_sqrt_c, maxnorm):
    xt = x_ref[...].T                                               # (Din, B): in-kernel transpose
    h = _hyperbolic_linear(xt, w1_ref[...], b1_ref[...],
                           sqrt_c, inv_sqrt_c, maxnorm)             # (H, B)
    h = jnp.maximum(h, 0.0)                                         # ReLU
    ot = _hyperbolic_linear(h, w2_ref[...], b2_ref[...],
                            sqrt_c, inv_sqrt_c, maxnorm)            # (Dout, B)
    o_ref[...] = ot.T                                               # (B, Dout)


def hyperbolic_nn(x, w1, b1, w2, b2, *, c=1.0):
    B, Din = x.shape
    H, _ = w1.shape
    Dout, _ = w2.shape

    # Static (compile-time) scalar constants.
    sqrt_c = math.sqrt(c)
    inv_sqrt_c = 1.0 / sqrt_c
    maxnorm = (1.0 - _PROJ_EPS) / sqrt_c

    b1c = b1.reshape(H, 1).astype(jnp.float32)     # bias as a column for (H, B) broadcast
    b2c = b2.reshape(Dout, 1).astype(jnp.float32)

    kernel = functools.partial(hyper_nn_kernel, sqrt_c=sqrt_c,
                               inv_sqrt_c=inv_sqrt_c, maxnorm=maxnorm)

    return pl.pallas_call(
        kernel,
        out_shape=jax.ShapeDtypeStruct((B, Dout), jnp.float32),
        grid=(1,),                              # single step: whole batch in VMEM
        in_specs=[
            pl.BlockSpec((B, Din), lambda i: (0, 0)),   # x   (full, row layout)
            pl.BlockSpec((H, Din), lambda i: (0, 0)),   # W1  (full)
            pl.BlockSpec((H, 1), lambda i: (0, 0)),     # b1 as a column
            pl.BlockSpec((Dout, H), lambda i: (0, 0)),  # W2  (full)
            pl.BlockSpec((Dout, 1), lambda i: (0, 0)),  # b2 as a column
        ],
        out_specs=pl.BlockSpec((B, Dout), lambda i: (0, 0)),
        compiler_params=pltpu.CompilerParams(
            dimension_semantics=("arbitrary",)),
    )(x.astype(jnp.float32), w1.astype(jnp.float32), b1c,
      w2.astype(jnp.float32), b2c)


# ---------------------------- pure-JAX reference ------------------------------

def _reference(x, w1, b1, w2, b2, c):
    sc = math.sqrt(c)
    maxn = (1.0 - _PROJ_EPS) / sc

    def project(y):
        n = jnp.maximum(jnp.sqrt(jnp.sum(y * y, -1, keepdims=True)), _MIN_NORM)
        return jnp.where(n > maxn, y / n * maxn, y)

    def expmap0(u):
        n = jnp.maximum(jnp.sqrt(jnp.sum(u * u, -1, keepdims=True)), _MIN_NORM)
        return project(jnp.tanh(sc * n) * u / (sc * n))

    def artanh(y):
        y = jnp.clip(y, -1.0 + _ATANH_EPS, 1.0 - _ATANH_EPS)
        return 0.5 * (jnp.log1p(y) - jnp.log1p(-y))

    def mobius_matvec(w, y):
        yn = jnp.maximum(jnp.sqrt(jnp.sum(y * y, -1, keepdims=True)), _MIN_NORM)
        mx = y @ w.T
        mxn = jnp.maximum(jnp.sqrt(jnp.sum(mx * mx, -1, keepdims=True)), _MIN_NORM)
        res = jnp.tanh(mxn / yn * artanh(sc * yn)) * mx / (mxn * sc)
        res = jnp.where(jnp.all(mx == 0.0, -1, keepdims=True), 0.0, res)
        return project(res)

    def layer(y, w, b):
        return expmap0(mobius_matvec(w, expmap0(y))) + b

    h = jnp.maximum(layer(x, w1, b1), 0.0)
    return layer(h, w2, b2)


# --------------------------------- driver ------------------------------------

if __name__ == "__main__":
    B, input_dim, hidden_dim, output_dim = 32, 16, 32, 8
    c = 1.0

    key = jax.random.PRNGKey(0)
    kx, kw1, kw2 = jax.random.split(key, 3)

    x = jax.random.normal(kx, (B, input_dim), dtype=jnp.float32)
    # Parameters initialized like __init__: weight ~ randn(out, in), bias = 0.
    w1 = jax.random.normal(kw1, (hidden_dim, input_dim), dtype=jnp.float32)
    b1 = jnp.zeros((hidden_dim,), dtype=jnp.float32)
    w2 = jax.random.normal(kw2, (output_dim, hidden_dim), dtype=jnp.float32)
    b2 = jnp.zeros((output_dim,), dtype=jnp.float32)

    out = hyperbolic_nn(x, w1, b1, w2, b2, c=c)
    out = jax.block_until_ready(out)
    assert out.shape == (B, output_dim) and out.dtype == jnp.float32

    ref = jax.block_until_ready(_reference(x, w1, b1, w2, b2, c))
    assert bool(jnp.allclose(out, ref, atol=1e-3, rtol=1e-3)), (
        f"max abs err {float(jnp.max(jnp.abs(out - ref)))}")

    print("KERNEL_OK")
</pallas_src>

<mosaic_0001>
module attributes {stable_mosaic.version = 11 : i64} {
  func.func @hyper_nn_kernel(%arg0: i32, %arg1: memref<32x16xf32, #tpu.memory_space<vmem>>, %arg2: memref<32x16xf32, #tpu.memory_space<vmem>>, %arg3: memref<32x1xf32, #tpu.memory_space<vmem>>, %arg4: memref<8x32xf32, #tpu.memory_space<vmem>>, %arg5: memref<8x1xf32, #tpu.memory_space<vmem>>, %arg6: memref<32x8xf32, #tpu.memory_space<vmem>>) attributes {dimension_semantics = [#tpu.dimension_semantics<arbitrary>], iteration_bounds = array<i64: 1>, scalar_prefetch = 0 : i64, scratch_operands = 0 : i64, tpu.core_type = #tpu.core_type<tc>, window_params = [{pipeline_mode = #tpu.pipeline_mode<synchronous>, transform_indices = @transform_0, window_bounds = array<i64: 32, 16>}, {pipeline_mode = #tpu.pipeline_mode<synchronous>, transform_indices = @transform_1, window_bounds = array<i64: 32, 16>}, {pipeline_mode = #tpu.pipeline_mode<synchronous>, transform_indices = @transform_2, window_bounds = array<i64: 32, 1>}, {pipeline_mode = #tpu.pipeline_mode<synchronous>, transform_indices = @transform_3, window_bounds = array<i64: 8, 32>}, {pipeline_mode = #tpu.pipeline_mode<synchronous>, transform_indices = @transform_4, window_bounds = array<i64: 8, 1>}, {pipeline_mode = #tpu.pipeline_mode<synchronous>, transform_indices = @transform_5, window_bounds = array<i64: 32, 8>}]} {
    %c0 = arith.constant 0 : index
    %c0_0 = arith.constant 0 : index
    %0 = vector.load %arg1[%c0, %c0_0] : memref<32x16xf32, #tpu.memory_space<vmem>>, vector<32x16xf32>
    %1 = tpu.transpose %0, [1, 0] : vector<32x16xf32> -> vector<16x32xf32>
    %c0_1 = arith.constant 0 : index
    %c0_2 = arith.constant 0 : index
    %2 = vector.load %arg2[%c0_1, %c0_2] : memref<32x16xf32, #tpu.memory_space<vmem>>, vector<32x16xf32>
    %c0_3 = arith.constant 0 : index
    %c0_4 = arith.constant 0 : index
    %3 = vector.load %arg3[%c0_3, %c0_4] : memref<32x1xf32, #tpu.memory_space<vmem>>, vector<32x1xf32>
    %4 = arith.mulf %1, %1 : vector<16x32xf32>
    %cst = arith.constant dense<0.000000e+00> : vector<32xf32>
    %5 = vector.multi_reduction <add>, %4, %cst [0] : vector<16x32xf32> to vector<32xf32>
    %6 = vector.shape_cast %5 : vector<32xf32> to vector<1x32xf32>
    %cst_5 = arith.constant 1.000000e-30 : f32
    %7 = vector.broadcast %cst_5 : f32 to vector<1x32xf32>
    %8 = arith.maximumf %6, %7 : vector<1x32xf32>
    %9 = math.sqrt %8 : vector<1x32xf32>
    %10 = math.rsqrt %8 : vector<1x32xf32>
    %cst_6 = arith.constant 1.000000e+00 : f32
    %11 = vector.broadcast %cst_6 : f32 to vector<1x32xf32>
    %12 = arith.mulf %11, %9 : vector<1x32xf32>
    %13 = math.tanh %12 : vector<1x32xf32>
    %cst_7 = arith.constant 1.000000e+00 : f32
    %14 = vector.broadcast %cst_7 : f32 to vector<1x32xf32>
    %15 = arith.mulf %14, %10 : vector<1x32xf32>
    %16 = arith.mulf %13, %15 : vector<1x32xf32>
    %17 = vector.broadcast %16 : vector<1x32xf32> to vector<16x32xf32>
    %18 = arith.mulf %17, %1 : vector<16x32xf32>
    %cst_8 = arith.constant 1.000000e+00 : f32
    %19 = vector.broadcast %cst_8 : f32 to vector<1x32xf32>
    %20 = arith.mulf %13, %19 : vector<1x32xf32>
    %cst_9 = arith.constant 1.000000e-15 : f32
    %21 = vector.broadcast %cst_9 : f32 to vector<1x32xf32>
    %22 = arith.maximumf %20, %21 : vector<1x32xf32>
    %23 = tpu.reciprocal %22 {approx = true} : vector<1x32xf32> -> vector<1x32xf32>
    %cst_10 = arith.constant 0.995999991 : f32
    %24 = vector.broadcast %cst_10 : f32 to vector<1x32xf32>
    %25 = arith.cmpf ogt, %22, %24 : vector<1x32xf32>
    %cst_11 = arith.constant 0.995999991 : f32
    %26 = vector.broadcast %cst_11 : f32 to vector<1x32xf32>
    %27 = arith.mulf %23, %26 : vector<1x32xf32>
    %28 = vector.broadcast %27 : vector<1x32xf32> to vector<16x32xf32>
    %29 = arith.mulf %28, %18 : vector<16x32xf32>
    %30 = vector.shape_cast %25 : vector<1x32xi1> to vector<1x32xi1>
    %31 = vector.broadcast %30 : vector<1x32xi1> to vector<16x32xi1>
    %32 = arith.select %31, %29, %18 : vector<16x32xi1>, vector<16x32xf32>
    %cst_12 = arith.constant 0.995999991 : f32
    %33 = vector.broadcast %cst_12 : f32 to vector<1x32xf32>
    %34 = arith.select %25, %33, %22 : vector<1x32xi1>, vector<1x32xf32>
    %cst_13 = arith.constant 1.00401604 : f32
    %35 = vector.broadcast %cst_13 : f32 to vector<1x32xf32>
    %36 = arith.select %25, %35, %23 : vector<1x32xi1>, vector<1x32xf32>
    %cst_14 = arith.constant dense<0.000000e+00> : vector<32x32xf32>
    %37 = tpu.matmul %2, %32, %cst_14 {dimension_numbers = #tpu.dot_dimension_numbers<[1], [0], [0], [1], [0, 0, 1, 1], [], []>} : vector<32x16xf32>, vector<16x32xf32>, vector<32x32xf32> -> vector<32x32xf32>
    %38 = arith.mulf %37, %37 : vector<32x32xf32>
    %cst_15 = arith.constant dense<0.000000e+00> : vector<32xf32>
    %39 = vector.multi_reduction <add>, %38, %cst_15 [0] : vector<32x32xf32> to vector<32xf32>
    %40 = vector.shape_cast %39 : vector<32xf32> to vector<1x32xf32>
    %cst_16 = arith.constant 1.000000e-30 : f32
    %41 = vector.broadcast %cst_16 : f32 to vector<1x32xf32>
    %42 = arith.maximumf %40, %41 : vector<1x32xf32>
    %43 = math.sqrt %42 : vector<1x32xf32>
    %44 = math.rsqrt %42 : vector<1x32xf32>
    %45 = arith.mulf %43, %36 : vector<1x32xf32>
    %cst_17 = arith.constant 1.000000e+00 : f32
    %46 = vector.broadcast %cst_17 : f32 to vector<1x32xf32>
    %47 = arith.mulf %46, %34 : vector<1x32xf32>
    %48 = math.log1p %47 : vector<1x32xf32>
    %cst_18 = arith.constant 0.000000e+00 : f32
    %49 = vector.broadcast %cst_18 : f32 to vector<1x32xf32>
    %50 = arith.subf %49, %47 : vector<1x32xf32>
    %51 = math.log1p %50 : vector<1x32xf32>
    %52 = arith.subf %48, %51 : vector<1x32xf32>
    %cst_19 = arith.constant 5.000000e-01 : f32
    %53 = vector.broadcast %cst_19 : f32 to vector<1x32xf32>
    %54 = arith.mulf %53, %52 : vector<1x32xf32>
    %55 = arith.mulf %45, %54 : vector<1x32xf32>
    %56 = math.tanh %55 : vector<1x32xf32>
    %cst_20 = arith.constant 1.000000e+00 : f32
    %57 = vector.broadcast %cst_20 : f32 to vector<1x32xf32>
    %58 = arith.mulf %57, %44 : vector<1x32xf32>
    %59 = arith.mulf %56, %58 : vector<1x32xf32>
    %60 = vector.broadcast %59 : vector<1x32xf32> to vector<32x32xf32>
    %61 = arith.mulf %60, %37 : vector<32x32xf32>
    %cst_21 = arith.constant 0.000000e+00 : f32
    %62 = vector.broadcast %cst_21 : f32 to vector<1x32xf32>
    %63 = arith.cmpf oeq, %40, %62 : vector<1x32xf32>
    %cst_22 = arith.constant 0.000000e+00 : f32
    %64 = vector.shape_cast %63 : vector<1x32xi1> to vector<1x32xi1>
    %65 = vector.broadcast %64 : vector<1x32xi1> to vector<32x32xi1>
    %66 = vector.broadcast %cst_22 : f32 to vector<32x32xf32>
    %67 = arith.select %65, %66, %61 : vector<32x32xi1>, vector<32x32xf32>
    %cst_23 = arith.constant 1.000000e+00 : f32
    %68 = vector.broadcast %cst_23 : f32 to vector<1x32xf32>
    %69 = arith.mulf %56, %68 : vector<1x32xf32>
    %cst_24 = arith.constant 1.000000e-15 : f32
    %70 = vector.broadcast %cst_24 : f32 to vector<1x32xf32>
    %71 = arith.maximumf %69, %70 : vector<1x32xf32>
    %cst_25 = arith.constant 1.000000e-15 : f32
    %72 = vector.broadcast %cst_25 : f32 to vector<1x32xf32>
    %73 = arith.select %63, %72, %71 : vector<1x32xi1>, vector<1x32xf32>
    %74 = tpu.reciprocal %73 {approx = true} : vector<1x32xf32> -> vector<1x32xf32>
    %cst_26 = arith.constant 0.995999991 : f32
    %75 = vector.broadcast %cst_26 : f32 to vector<1x32xf32>
    %76 = arith.cmpf ogt, %73, %75 : vector<1x32xf32>
    %cst_27 = arith.constant 0.995999991 : f32
    %77 = vector.broadcast %cst_27 : f32 to vector<1x32xf32>
    %78 = arith.mulf %74, %77 : vector<1x32xf32>
    %79 = vector.broadcast %78 : vector<1x32xf32> to vector<32x32xf32>
    %80 = arith.mulf %79, %67 : vector<32x32xf32>
    %81 = vector.shape_cast %76 : vector<1x32xi1> to vector<1x32xi1>
    %82 = vector.broadcast %81 : vector<1x32xi1> to vector<32x32xi1>
    %83 = arith.select %82, %80, %67 : vector<32x32xi1>, vector<32x32xf32>
    %cst_28 = arith.constant 0.995999991 : f32
    %84 = vector.broadcast %cst_28 : f32 to vector<1x32xf32>
    %85 = arith.select %76, %84, %73 : vector<1x32xi1>, vector<1x32xf32>
    %cst_29 = arith.constant 1.00401604 : f32
    %86 = vector.broadcast %cst_29 : f32 to vector<1x32xf32>
    %87 = arith.select %76, %86, %74 : vector<1x32xi1>, vector<1x32xf32>
    %cst_30 = arith.constant 1.000000e+00 : f32
    %88 = vector.broadcast %cst_30 : f32 to vector<1x32xf32>
    %89 = arith.mulf %88, %85 : vector<1x32xf32>
    %90 = math.tanh %89 : vector<1x32xf32>
    %cst_31 = arith.constant 1.000000e+00 : f32
    %91 = vector.broadcast %cst_31 : f32 to vector<1x32xf32>
    %92 = arith.mulf %91, %87 : vector<1x32xf32>
    %93 = arith.mulf %90, %92 : vector<1x32xf32>
    %94 = vector.broadcast %93 : vector<1x32xf32> to vector<32x32xf32>
    %95 = arith.mulf %94, %83 : vector<32x32xf32>
    %cst_32 = arith.constant 1.000000e+00 : f32
    %96 = vector.broadcast %cst_32 : f32 to vector<1x32xf32>
    %97 = arith.mulf %90, %96 : vector<1x32xf32>
    %cst_33 = arith.constant 1.000000e-15 : f32
    %98 = vector.broadcast %cst_33 : f32 to vector<1x32xf32>
    %99 = arith.maximumf %97, %98 : vector<1x32xf32>
    %100 = tpu.reciprocal %99 {approx = true} : vector<1x32xf32> -> vector<1x32xf32>
    %cst_34 = arith.constant 0.995999991 : f32
    %101 = vector.broadcast %cst_34 : f32 to vector<1x32xf32>
    %102 = arith.cmpf ogt, %99, %101 : vector<1x32xf32>
    %cst_35 = arith.constant 0.995999991 : f32
    %103 = vector.broadcast %cst_35 : f32 to vector<1x32xf32>
    %104 = arith.mulf %100, %103 : vector<1x32xf32>
    %105 = vector.broadcast %104 : vector<1x32xf32> to vector<32x32xf32>
    %106 = arith.mulf %105, %95 : vector<32x32xf32>
    %107 = vector.shape_cast %102 : vector<1x32xi1> to vector<1x32xi1>
    %108 = vector.broadcast %107 : vector<1x32xi1> to vector<32x32xi1>
    %109 = arith.select %108, %106, %95 : vector<32x32xi1>, vector<32x32xf32>
    %110 = vector.broadcast %3 : vector<32x1xf32> to vector<32x32xf32>
    %111 = arith.addf %109, %110 : vector<32x32xf32>
    %cst_36 = arith.constant 0.000000e+00 : f32
    %112 = vector.broadcast %cst_36 : f32 to vector<32x32xf32>
    %113 = arith.maximumf %111, %112 : vector<32x32xf32>
    %c0_37 = arith.constant 0 : index
    %c0_38 = arith.constant 0 : index
    %114 = vector.load %arg4[%c0_37, %c0_38] : memref<8x32xf32, #tpu.memory_space<vmem>>, vector<8x32xf32>
    %c0_39 = arith.constant 0 : index
    %c0_40 = arith.constant 0 : index
    %115 = vector.load %arg5[%c0_39, %c0_40] : memref<8x1xf32, #tpu.memory_space<vmem>>, vector<8x1xf32>
    %116 = arith.mulf %113, %113 : vector<32x32xf32>
    %cst_41 = arith.constant dense<0.000000e+00> : vector<32xf32>
    %117 = vector.multi_reduction <add>, %116, %cst_41 [0] : vector<32x32xf32> to vector<32xf32>
    %118 = vector.shape_cast %117 : vector<32xf32> to vector<1x32xf32>
    %cst_42 = arith.constant 1.000000e-30 : f32
    %119 = vector.broadcast %cst_42 : f32 to vector<1x32xf32>
    %120 = arith.maximumf %118, %119 : vector<1x32xf32>
    %121 = math.sqrt %120 : vector<1x32xf32>
    %122 = math.rsqrt %120 : vector<1x32xf32>
    %cst_43 = arith.constant 1.000000e+00 : f32
    %123 = vector.broadcast %cst_43 : f32 to vector<1x32xf32>
    %124 = arith.mulf %123, %121 : vector<1x32xf32>
    %125 = math.tanh %124 : vector<1x32xf32>
    %cst_44 = arith.constant 1.000000e+00 : f32
    %126 = vector.broadcast %cst_44 : f32 to vector<1x32xf32>
    %127 = arith.mulf %126, %122 : vector<1x32xf32>
    %128 = arith.mulf %125, %127 : vector<1x32xf32>
    %129 = vector.broadcast %128 : vector<1x32xf32> to vector<32x32xf32>
    %130 = arith.mulf %129, %113 : vector<32x32xf32>
    %cst_45 = arith.constant 1.000000e+00 : f32
    %131 = vector.broadcast %cst_45 : f32 to vector<1x32xf32>
    %132 = arith.mulf %125, %131 : vector<1x32xf32>
    %cst_46 = arith.constant 1.000000e-15 : f32
    %133 = vector.broadcast %cst_46 : f32 to vector<1x32xf32>
    %134 = arith.maximumf %132, %133 : vector<1x32xf32>
    %135 = tpu.reciprocal %134 {approx = true} : vector<1x32xf32> -> vector<1x32xf32>
    %cst_47 = arith.constant 0.995999991 : f32
    %136 = vector.broadcast %cst_47 : f32 to vector<1x32xf32>
    %137 = arith.cmpf ogt, %134, %136 : vector<1x32xf32>
    %cst_48 = arith.constant 0.995999991 : f32
    %138 = vector.broadcast %cst_48 : f32 to vector<1x32xf32>
    %139 = arith.mulf %135, %138 : vector<1x32xf32>
    %140 = vector.broadcast %139 : vector<1x32xf32> to vector<32x32xf32>
    %141 = arith.mulf %140, %130 : vector<32x32xf32>
    %142 = vector.shape_cast %137 : vector<1x32xi1> to vector<1x32xi1>
    %143 = vector.broadcast %142 : vector<1x32xi1> to vector<32x32xi1>
    %144 = arith.select %143, %141, %130 : vector<32x32xi1>, vector<32x32xf32>
    %cst_49 = arith.constant 0.995999991 : f32
    %145 = vector.broadcast %cst_49 : f32 to vector<1x32xf32>
    %146 = arith.select %137, %145, %134 : vector<1x32xi1>, vector<1x32xf32>
    %cst_50 = arith.constant 1.00401604 : f32
    %147 = vector.broadcast %cst_50 : f32 to vector<1x32xf32>
    %148 = arith.select %137, %147, %135 : vector<1x32xi1>, vector<1x32xf32>
    %cst_51 = arith.constant dense<0.000000e+00> : vector<8x32xf32>
    %149 = tpu.matmul %114, %144, %cst_51 {dimension_numbers = #tpu.dot_dimension_numbers<[1], [0], [0], [1], [0, 0, 1, 1], [], []>} : vector<8x32xf32>, vector<32x32xf32>, vector<8x32xf32> -> vector<8x32xf32>
    %150 = arith.mulf %149, %149 : vector<8x32xf32>
    %cst_52 = arith.constant dense<0.000000e+00> : vector<32xf32>
    %151 = vector.multi_reduction <add>, %150, %cst_52 [0] : vector<8x32xf32> to vector<32xf32>
    %152 = vector.shape_cast %151 : vector<32xf32> to vector<1x32xf32>
    %cst_53 = arith.constant 1.000000e-30 : f32
    %153 = vector.broadcast %cst_53 : f32 to vector<1x32xf32>
    %154 = arith.maximumf %152, %153 : vector<1x32xf32>
    %155 = math.sqrt %154 : vector<1x32xf32>
    %156 = math.rsqrt %154 : vector<1x32xf32>
    %157 = arith.mulf %155, %148 : vector<1x32xf32>
    %cst_54 = arith.constant 1.000000e+00 : f32
    %158 = vector.broadcast %cst_54 : f32 to vector<1x32xf32>
    %159 = arith.mulf %158, %146 : vector<1x32xf32>
    %160 = math.log1p %159 : vector<1x32xf32>
    %cst_55 = arith.constant 0.000000e+00 : f32
    %161 = vector.broadcast %cst_55 : f32 to vector<1x32xf32>
    %162 = arith.subf %161, %159 : vector<1x32xf32>
    %163 = math.log1p %162 : vector<1x32xf32>
    %164 = arith.subf %160, %163 : vector<1x32xf32>
    %cst_56 = arith.constant 5.000000e-01 : f32
    %165 = vector.broadcast %cst_56 : f32 to vector<1x32xf32>
    %166 = arith.mulf %165, %164 : vector<1x32xf32>
    %167 = arith.mulf %157, %166 : vector<1x32xf32>
    %168 = math.tanh %167 : vector<1x32xf32>
    %cst_57 = arith.constant 1.000000e+00 : f32
    %169 = vector.broadcast %cst_57 : f32 to vector<1x32xf32>
    %170 = arith.mulf %169, %156 : vector<1x32xf32>
    %171 = arith.mulf %168, %170 : vector<1x32xf32>
    %172 = vector.broadcast %171 : vector<1x32xf32> to vector<8x32xf32>
    %173 = arith.mulf %172, %149 : vector<8x32xf32>
    %cst_58 = arith.constant 0.000000e+00 : f32
    %174 = vector.broadcast %cst_58 : f32 to vector<1x32xf32>
    %175 = arith.cmpf oeq, %152, %174 : vector<1x32xf32>
    %cst_59 = arith.constant 0.000000e+00 : f32
    %176 = vector.shape_cast %175 : vector<1x32xi1> to vector<1x32xi1>
    %177 = vector.broadcast %176 : vector<1x32xi1> to vector<8x32xi1>
    %178 = vector.broadcast %cst_59 : f32 to vector<8x32xf32>
    %179 = arith.select %177, %178, %173 : vector<8x32xi1>, vector<8x32xf32>
    %cst_60 = arith.constant 1.000000e+00 : f32
    %180 = vector.broadcast %cst_60 : f32 to vector<1x32xf32>
    %181 = arith.mulf %168, %180 : vector<1x32xf32>
    %cst_61 = arith.constant 1.000000e-15 : f32
    %182 = vector.broadcast %cst_61 : f32 to vector<1x32xf32>
    %183 = arith.maximumf %181, %182 : vector<1x32xf32>
    %cst_62 = arith.constant 1.000000e-15 : f32
    %184 = vector.broadcast %cst_62 : f32 to vector<1x32xf32>
    %185 = arith.select %175, %184, %183 : vector<1x32xi1>, vector<1x32xf32>
    %186 = tpu.reciprocal %185 {approx = true} : vector<1x32xf32> -> vector<1x32xf32>
    %cst_63 = arith.constant 0.995999991 : f32
    %187 = vector.broadcast %cst_63 : f32 to vector<1x32xf32>
    %188 = arith.cmpf ogt, %185, %187 : vector<1x32xf32>
    %cst_64 = arith.constant 0.995999991 : f32
    %189 = vector.broadcast %cst_64 : f32 to vector<1x32xf32>
    %190 = arith.mulf %186, %189 : vector<1x32xf32>
    %191 = vector.broadcast %190 : vector<1x32xf32> to vector<8x32xf32>
    %192 = arith.mulf %191, %179 : vector<8x32xf32>
    %193 = vector.shape_cast %188 : vector<1x32xi1> to vector<1x32xi1>
    %194 = vector.broadcast %193 : vector<1x32xi1> to vector<8x32xi1>
    %195 = arith.select %194, %192, %179 : vector<8x32xi1>, vector<8x32xf32>
    %cst_65 = arith.constant 0.995999991 : f32
    %196 = vector.broadcast %cst_65 : f32 to vector<1x32xf32>
    %197 = arith.select %188, %196, %185 : vector<1x32xi1>, vector<1x32xf32>
    %cst_66 = arith.constant 1.00401604 : f32
    %198 = vector.broadcast %cst_66 : f32 to vector<1x32xf32>
    %199 = arith.select %188, %198, %186 : vector<1x32xi1>, vector<1x32xf32>
    %cst_67 = arith.constant 1.000000e+00 : f32
    %200 = vector.broadcast %cst_67 : f32 to vector<1x32xf32>
    %201 = arith.mulf %200, %197 : vector<1x32xf32>
    %202 = math.tanh %201 : vector<1x32xf32>
    %cst_68 = arith.constant 1.000000e+00 : f32
    %203 = vector.broadcast %cst_68 : f32 to vector<1x32xf32>
    %204 = arith.mulf %203, %199 : vector<1x32xf32>
    %205 = arith.mulf %202, %204 : vector<1x32xf32>
    %206 = vector.broadcast %205 : vector<1x32xf32> to vector<8x32xf32>
    %207 = arith.mulf %206, %195 : vector<8x32xf32>
    %cst_69 = arith.constant 1.000000e+00 : f32
    %208 = vector.broadcast %cst_69 : f32 to vector<1x32xf32>
    %209 = arith.mulf %202, %208 : vector<1x32xf32>
    %cst_70 = arith.constant 1.000000e-15 : f32
    %210 = vector.broadcast %cst_70 : f32 to vector<1x32xf32>
    %211 = arith.maximumf %209, %210 : vector<1x32xf32>
    %212 = tpu.reciprocal %211 {approx = true} : vector<1x32xf32> -> vector<1x32xf32>
    %cst_71 = arith.constant 0.995999991 : f32
    %213 = vector.broadcast %cst_71 : f32 to vector<1x32xf32>
    %214 = arith.cmpf ogt, %211, %213 : vector<1x32xf32>
    %cst_72 = arith.constant 0.995999991 : f32
    %215 = vector.broadcast %cst_72 : f32 to vector<1x32xf32>
    %216 = arith.mulf %212, %215 : vector<1x32xf32>
    %217 = vector.broadcast %216 : vector<1x32xf32> to vector<8x32xf32>
    %218 = arith.mulf %217, %207 : vector<8x32xf32>
    %219 = vector.shape_cast %214 : vector<1x32xi1> to vector<1x32xi1>
    %220 = vector.broadcast %219 : vector<1x32xi1> to vector<8x32xi1>
    %221 = arith.select %220, %218, %207 : vector<8x32xi1>, vector<8x32xf32>
    %222 = vector.broadcast %115 : vector<8x1xf32> to vector<8x32xf32>
    %223 = arith.addf %221, %222 : vector<8x32xf32>
    %224 = tpu.transpose %223, [1, 0] : vector<8x32xf32> -> vector<32x8xf32>
    %c0_73 = arith.constant 0 : index
    %c0_74 = arith.constant 0 : index
    %225 = vector.load %arg6[%c0_73, %c0_74] : memref<32x8xf32, #tpu.memory_space<vmem>>, vector<32x8xf32>
    tpu.vector_store %arg6[%c0_73, %c0_74], %224 {strides = array<i32>} : memref<32x8xf32, #tpu.memory_space<vmem>>, vector<32x8xf32>,
    return
  }
  func.func @transform_0(%arg0: i32) -> (i32, i32) {
    %c0_i32 = arith.constant 0 : i32
    %c0_i32_0 = arith.constant 0 : i32
    %c0_i32_1 = arith.constant 0 : i32
    return %c0_i32, %c0_i32_0 : i32, i32
  }
  func.func @transform_1(%arg0: i32) -> (i32, i32) {
    %c0_i32 = arith.constant 0 : i32
    %c0_i32_0 = arith.constant 0 : i32
    %c0_i32_1 = arith.constant 0 : i32
    return %c0_i32, %c0_i32_0 : i32, i32
  }
  func.func @transform_2(%arg0: i32) -> (i32, i32) {
    %c0_i32 = arith.constant 0 : i32
    %c0_i32_0 = arith.constant 0 : i32
    %c0_i32_1 = arith.constant 0 : i32
    return %c0_i32, %c0_i32_0 : i32, i32
  }
  func.func @transform_3(%arg0: i32) -> (i32, i32) {
    %c0_i32 = arith.constant 0 : i32
    %c0_i32_0 = arith.constant 0 : i32
    %c0_i32_1 = arith.constant 0 : i32
    return %c0_i32, %c0_i32_0 : i32, i32
  }
  func.func @transform_4(%arg0: i32) -> (i32, i32) {
    %c0_i32 = arith.constant 0 : i32
    %c0_i32_0 = arith.constant 0 : i32
    %c0_i32_1 = arith.constant 0 : i32
    return %c0_i32, %c0_i32_0 : i32, i32
  }
  func.func @transform_5(%arg0: i32) -> (i32, i32) {
    %c0_i32 = arith.constant 0 : i32
    %c0_i32_0 = arith.constant 0 : i32
    %c0_i32_1 = arith.constant 0 : i32
    return %c0_i32, %c0_i32_0 : i32, i32
  }
}

</mosaic_0001>

<llo_original>
// kernel: tpu_custom_call.1
$region0: #{tpu_custom_call.1}
  #allocation0 [shape = 'u32[]', space=smem, size = 0x4, offset = 0x4, fixed_abs, tag = 'smem constant byte address 0x4 - core index']
  #allocation1 [shape = 'u32[144,128]{1,0:T(1,128)}', space=vmem, size = 0x12000, scoped, tag = 'internal scratch']
  %s0 = inlined_call_operand.vmem [shape: f32[32,16], index: 0, kind: input, shape index: {}]
  %s1 = inlined_call_operand.vmem [shape: f32[32,16], index: 1, kind: input, shape index: {}]
  %s2 = inlined_call_operand.vmem [shape: f32[32,1], index: 2, kind: input, shape index: {}]
  %s3 = inlined_call_operand.vmem [shape: f32[8,32], index: 3, kind: input, shape index: {}]
  %s4 = inlined_call_operand.vmem [shape: f32[8,1], index: 4, kind: input, shape index: {}]
  %s5 = inlined_call_operand.vmem [shape: f32[32,8], index: 5, kind: output, shape index: {}]
  %s6 = sld [smem:[#allocation0]]
  $region30: #{tpu_custom_call.1} parent=0
    _
  %s8 = ssub.s32 1, %s6
  %s9 = scalar_select 0, %s8, %s6
  // Predicated region
  $region2: #{tpu_custom_call.1} parent=0 // pred_check
    _
  $region3: #{tpu_custom_call.1} parent=0 // pred_check_branch
    %11 = sbr.rel (0) target = $region5
  $region4: #{tpu_custom_call.1} parent=0 // pred_region
    _
  $region5: #{tpu_custom_call.1} parent=0 // pred_fallthru
    _
  // Predicated region
  $region6: #{tpu_custom_call.1} parent=0 // pred_check
    _
  $region7: #{tpu_custom_call.1} parent=0 // pred_check_branch
    %13 = sbr.rel (0) target = $region9
  $region8: #{tpu_custom_call.1} parent=0 // pred_region
    _
  $region9: #{tpu_custom_call.1} parent=0 // pred_fallthru
    _
  // Predicated region
  $region10: #{tpu_custom_call.1} parent=0 // pred_check
    _
  $region11: #{tpu_custom_call.1} parent=0 // pred_check_branch
    %15 = sbr.rel (0) target = $region13
  $region12: #{tpu_custom_call.1} parent=0 // pred_region
    _
  $region13: #{tpu_custom_call.1} parent=0 // pred_fallthru
    _
  // Predicated region
  $region14: #{tpu_custom_call.1} parent=0 // pred_check
    _
  $region15: #{tpu_custom_call.1} parent=0 // pred_check_branch
    %17 = sbr.rel (0) target = $region17
  $region16: #{tpu_custom_call.1} parent=0 // pred_region
    _
  $region17: #{tpu_custom_call.1} parent=0 // pred_fallthru
    _
  // Predicated region
  $region18: #{tpu_custom_call.1} parent=0 // pred_check
    _
  $region19: #{tpu_custom_call.1} parent=0 // pred_check_branch
    %19 = sbr.rel (0) target = $region21
  $region20: #{tpu_custom_call.1} parent=0 // pred_region
    _
  $region21: #{tpu_custom_call.1} parent=0 // pred_fallthru
    _
  %v20 = vld [vmem:[%s0] sm:$0xff]
  %v21 = vld [vmem:[%s0 + $0x8] sm:$0xff]
  %v22 = vld [vmem:[%s0 + $0x10] sm:$0xff]
  %v23 = vld [vmem:[%s0 + $0x18] sm:$0xff]
  %24 = vxpose.xlu0.b32.start [1/16] %v20, 128
  %25 = vxpose.xlu0.b32.cont [2/16] %v21, 128
  %26 = vxpose.xlu0.b32.cont [3/16] %v22, 128
  %27 = vxpose.xlu0.b32.cont [4/16] %v23, 128
  %28 = vxpose.xlu0.b32.cont [5/16] 0.0, 128
  %29 = vxpose.xlu0.b32.cont [6/16] 0.0, 128
  %30 = vxpose.xlu0.b32.cont [7/16] 0.0, 128
  %31 = vxpose.xlu0.b32.cont [8/16] 0.0, 128
  %32 = vxpose.xlu0.b32.cont [9/16] 0.0, 128
  %33 = vxpose.xlu0.b32.cont [10/16] 0.0, 128
  %34 = vxpose.xlu0.b32.cont [11/16] 0.0, 128
  %35 = vxpose.xlu0.b32.cont [12/16] 0.0, 128
  %36 = vxpose.xlu0.b32.cont [13/16] 0.0, 128
  %37 = vxpose.xlu0.b32.cont [14/16] 0.0, 128
  %38 = vxpose.xlu0.b32.cont [15/16] 0.0, 128
  %39 = vxpose.xlu0.b32.end [16/16] 0.0, 128
  %v40 = vpop.trf.xlu0
  %v41 = vpop.trf.xlu0
  %v42 = vpop.trf.xlu0
  %v43 = vpop.trf.xlu0
  %v44 = vpop.trf.xlu0
  %v45 = vpop.trf.xlu0
  %v46 = vpop.trf.xlu0
  %v47 = vpop.trf.xlu0
  %v48 = vpop.trf.xlu0
  %v49 = vpop.trf.xlu0
  %v50 = vpop.trf.xlu0
  %v51 = vpop.trf.xlu0
  %v52 = vpop.trf.xlu0
  %v53 = vpop.trf.xlu0
  %v54 = vpop.trf.xlu0
  %v55 = vpop.trf.xlu0
  %v56 = vld [vmem:[%s1] sm:$0xff]
  %v57 = vld [vmem:[%s1 + $0x8] sm:$0xff]
  %v58 = vld [vmem:[%s1 + $0x10] sm:$0xff]
  %v59 = vld [vmem:[%s1 + $0x18] sm:$0xff]
  %v60 = vld [vmem:[%s2] sm:$0xff]
  %v61 = vld [vmem:[%s2 + $0x8] sm:$0xff]
  %v62 = vld [vmem:[%s2 + $0x10] sm:$0xff]
  %v63 = vld [vmem:[%s2 + $0x18] sm:$0xff]
  %v64 = vmul.f32 %v40, %v40
  %v65 = vmul.f32 %v41, %v41
  %vm66 = vcmask 261120
  %v67 = vsel %vm66, %v64, 0.0
  %v68 = vsel %vm66, %v65, 0.0
  %v69 = vadd.f32 %v67, %v68
  %v70 = vrot.slane %v69, 4
  %v71 = vadd.f32 %v69, %v70
  %v72 = vrot.slane %v71, 2
  %v73 = vadd.f32 %v71, %v72
  %v74 = vrot.slane %v73, 1
  %v75 = vadd.f32 %v73, %v74
  %v76 = vmax.f32 %v75, 1e-30
  %v77 = vrsqrt.pop %v76
  %v78 = vmul.f32 %v76, %v77
  %vm79 = vcmp.eq.f32.partialorder %v76, inf
  %v80 = vsel %vm79, %v76, %v78
  %vm81 = vcmp.eq.f32.partialorder %v76, 0.0
  %v82 = vand.u32 %v76, 2147483648
  %v83 = vsel %vm81, %v82, %v80
  %v84 = vrsqrt.pop %v76
  %v85 = vtanh.pop %v83
  %v86 = vmul.f32 %v85, %v84
  %v87 = vmul.f32 %v86, %v40
  %v88 = vmul.f32 %v86, %v41
  %v89 = vmax.f32 %v85, 1e-15
  %v90 = vrcp.pop %v89
  %vm91 = vcmp.gt.f32.partialorder %v89, 0.996
  %v92 = vmul.f32 %v90, 0.996
  %v93 = vmul.f32 %v92, %v87
  %v94 = vmul.f32 %v92, %v88
  %v95 = vsel %vm91, 1, 0
  %vm96 = vcmp.eq.s32.totalorder %v95, 1
  %v97 = vsel %vm96, %v93, %v87
  %v98 = vsel %vm96, %v94, %v88
  %v99 = vsel %vm91, 0.996, %v89
  %v100 = vsel %vm91, 1.004016, %v90
  %vm101 = vcmask 130048
  %v103 = vsel %vm101, %v56, 0
  %v106 = vsel %vm101, %v57, 0
  %v109 = vsel %vm101, %v58, 0
  %v112 = vsel %vm101, %v59, 0
  %114 = vmatprep.subr.mxu0 0.0
  %115 = vmatpush1.msra.mxu0 %v97
  %116 = vmatprep.subr.mxu0 0.0
  %117 = vmatpush1.msra.mxu0 %v98
  %118 = vmatprep.subr.mxu0 0.0
  %119 = vmatpush1.msra.mxu0 0.0
  %120 = vmatprep.subr.mxu0 0.0
  %121 = vmatpush1.msra.mxu0 0.0
  %122 = vmatprep.subr.mxu0 0.0
  %123 = vmatpush1.msra.mxu0 0.0
  %124 = vmatprep.subr.mxu0 0.0
  %125 = vmatpush1.msra.mxu0 0.0
  %126 = vmatprep.subr.mxu0 0.0
  %127 = vmatpush1.msra.mxu0 0.0
  %128 = vmatprep.subr.mxu0 0.0
  %129 = vmatpush1.msra.mxu0 0.0
  %130 = vmatprep.subr.mxu0 0.0
  %131 = vmatpush1.msra.mxu0 0.0
  %132 = vmatprep.subr.mxu0 0.0
  %133 = vmatpush1.msra.mxu0 0.0
  %134 = vmatprep.subr.mxu0 0.0
  %135 = vmatpush1.msra.mxu0 0.0
  %136 = vmatprep.subr.mxu0 0.0
  %137 = vmatpush1.msra.mxu0 0.0
  %138 = vmatprep.subr.mxu0 0.0
  %139 = vmatpush1.msra.mxu0 0.0
  %140 = vmatprep.subr.mxu0 0.0
  %141 = vmatpush1.msra.mxu0 0.0
  %142 = vmatprep.subr.mxu0 0.0
  %143 = vmatpush1.msra.mxu0 0.0
  %144 = vmatprep.subr.mxu0 0.0
  %145 = vmatpush1.msra.mxu0 0.0
  %146 = vmatprep.subr.mxu0 0.0
  %147 = vmatpush1.msra.mxu0 0.0
  %148 = vmatprep.subr.mxu0 0.0
  %149 = vmatpush1.msra.mxu0 0.0
  %150 = vmatprep.subr.mxu0 0.0
  %151 = vmatpush1.msra.mxu0 0.0
  %152 = vmatprep.subr.mxu0 0.0
  %153 = vmatpush1.msra.mxu0 0.0
  %154 = vmatprep.subr.mxu0 0.0
  %155 = vmatpush1.msra.mxu0 0.0
  %156 = vmatprep.subr.mxu0 0.0
  %157 = vmatpush1.msra.mxu0 0.0
  %158 = vmatprep.subr.mxu0 0.0
  %159 = vmatpush1.msra.mxu0 0.0
  %160 = vmatprep.subr.mxu0 0.0
  %161 = vmatpush1.msra.mxu0 0.0
  %162 = vmatprep.subr.mxu0 0.0
  %163 = vmatpush1.msra.mxu0 0.0
  %164 = vmatprep.subr.mxu0 0.0
  %165 = vmatpush1.msra.mxu0 0.0
  %166 = vmatprep.subr.mxu0 0.0
  %167 = vmatpush1.msra.mxu0 0.0
  %168 = vmatprep.subr.mxu0 0.0
  %169 = vmatpush1.msra.mxu0 0.0
  %170 = vmatprep.subr.mxu0 0.0
  %171 = vmatpush1.msra.mxu0 0.0
  %172 = vmatprep.subr.mxu0 0.0
  %173 = vmatpush1.msra.mxu0 0.0
  %174 = vmatprep.subr.mxu0 0.0
  %175 = vmatpush1.msra.mxu0 0.0
  %176 = vmatprep.subr.mxu0 0.0
  %177 = vmatpush1.msra.mxu0 0.0
  %178 = vmatprep.mubr.f32.mxu0 0.0
  %179 = vmatmul.mubr.f32.gmra.mrb[0].mxu0 %v103
  %v180 = vpop.f32.mrb[0].mxu0
  %v181 = vadd.f32 0.0, %v180
  %v182 = vpop.f32.mrb[0].mxu0
  %183 = vmatprep.mubr.f32.mxu0 0.0
  %184 = vmatmul.mubr.f32.gmra.mrb[0].mxu0 %v106
  %v185 = vpop.f32.mrb[0].mxu0
  %v186 = vadd.f32 0.0, %v185
  %v187 = vpop.f32.mrb[0].mxu0
  %188 = vmatprep.mubr.f32.mxu0 0.0
  %189 = vmatmul.mubr.f32.gmra.mrb[0].mxu0 %v109
  %v190 = vpop.f32.mrb[0].mxu0
  %v191 = vadd.f32 0.0, %v190
  %v192 = vpop.f32.mrb[0].mxu0
  %193 = vmatprep.mubr.f32.mxu0 0.0
  %194 = vmatmul.mubr.f32.gmra.mrb[0].mxu0 %v112
  %v195 = vpop.f32.mrb[0].mxu0
  %v196 = vadd.f32 0.0, %v195
  %v197 = vpop.f32.mrb[0].mxu0
  %198 = vdwg.mxu0
  %v199 = vmul.f32 %v181, %v181
  %v200 = vmul.f32 %v186, %v186
  %v201 = vmul.f32 %v191, %v191
  %v202 = vmul.f32 %v196, %v196
  %v203 = vsel %vm66, %v199, 0.0
  %v204 = vsel %vm66, %v200, 0.0
  %v205 = vadd.f32 %v203, %v204
  %v206 = vsel %vm66, %v201, 0.0
  %v207 = vadd.f32 %v205, %v206
  %v208 = vsel %vm66, %v202, 0.0
  %v209 = vadd.f32 %v207, %v208
  %v210 = vrot.slane %v209, 4
  %v211 = vadd.f32 %v209, %v210
  %v212 = vrot.slane %v211, 2
  %v213 = vadd.f32 %v211, %v212
  %v214 = vrot.slane %v213, 1
  %v215 = vadd.f32 %v213, %v214
  %v216 = vmax.f32 %v215, 1e-30
  %v217 = vrsqrt.pop %v216
  %v218 = vmul.f32 %v216, %v217
  %vm219 = vcmp.eq.f32.partialorder %v216, inf
  %v220 = vsel %vm219, %v216, %v218
  %vm221 = vcmp.eq.f32.partialorder %v216, 0.0
  %v222 = vand.u32 %v216, 2147483648
  %v223 = vsel %vm221, %v222, %v220
  %v224 = vrsqrt.pop %v216
  %v225 = vmul.f32 %v223, %v100
  %v226 = vadd.f32 %v99, 1.0
  %v227 = vlog2.pop %v226
  %v228 = vmul.f32 %v227, 0.6931472
  %v229 = vmul.f32 -0.5, %v99
  %v230 = vadd.f32 %v229, 1.0
  %v231 = vmul.f32 %v230, %v99
  %v232 = vand.u32 2147483647, %v99
  %vm233 = vcmp.lt.f32.partialorder %v232, 0.0004427343
  %v234 = vsel %vm233, %v231, %v228
  %v235 = vsub.f32 0.0, %v99
  %v236 = vadd.f32 %v235, 1.0
  %v237 = vlog2.pop %v236
  %v238 = vmul.f32 %v237, 0.6931472
  %v239 = vmul.f32 -0.5, %v235
  %v240 = vadd.f32 %v239, 1.0
  %v241 = vmul.f32 %v240, %v235
  %v242 = vand.u32 2147483647, %v235
  %vm243 = vcmp.lt.f32.partialorder %v242, 0.0004427343
  %v244 = vsel %vm243, %v241, %v238
  %v245 = vsub.f32 %v234, %v244
  %v246 = vmul.f32 %v245, 0.5
  %v247 = vmul.f32 %v225, %v246
  %v248 = vtanh.pop %v247
  %v249 = vmul.f32 %v248, %v224
  %v250 = vmul.f32 %v249, %v181
  %v251 = vmul.f32 %v249, %v186
  %v252 = vmul.f32 %v249, %v191
  %v253 = vmul.f32 %v249, %v196
  %vm254 = vcmp.eq.f32.partialorder %v215, 0.0
  %v255 = vsel %vm254, 1, 0
  %vm256 = vcmp.eq.s32.totalorder %v255, 1
  %v257 = vsel %vm256, 0.0, %v250
  %v258 = vsel %vm256, 0.0, %v251
  %v259 = vsel %vm256, 0.0, %v252
  %v260 = vsel %vm256, 0.0, %v253
  %v261 = vmax.f32 %v248, 1e-15
  %v262 = vsel %vm254, 1e-15, %v261
  %v263 = vrcp.pop %v262
  %vm264 = vcmp.gt.f32.partialorder %v262, 0.996
  %v265 = vmul.f32 %v263, 0.996
  %v266 = vmul.f32 %v265, %v257
  %v267 = vmul.f32 %v265, %v258
  %v268 = vmul.f32 %v265, %v259
  %v269 = vmul.f32 %v265, %v260
  %v270 = vsel %vm264, 1, 0
  %vm271 = vcmp.eq.s32.totalorder %v270, 1
  %v272 = vsel %vm271, %v266, %v257
  %v273 = vsel %vm271, %v267, %v258
  %v274 = vsel %vm271, %v268, %v259
  %v275 = vsel %vm271, %v269, %v260
  %v276 = vsel %vm264, 0.996, %v262
  %v277 = vsel %vm264, 1.004016, %v263
  %v278 = vtanh.pop %v276
  %v279 = vmul.f32 %v278, %v277
  %v280 = vmul.f32 %v279, %v272
  %v281 = vmul.f32 %v279, %v273
  %v282 = vmul.f32 %v279, %v274
  %v283 = vmul.f32 %v279, %v275
  %v284 = vmax.f32 %v278, 1e-15
  %v285 = vrcp.pop %v284
  %vm286 = vcmp.gt.f32.partialorder %v284, 0.996
  %v287 = vmul.f32 %v285, 0.996
  %v288 = vmul.f32 %v287, %v280
  %v289 = vmul.f32 %v287, %v281
  %v290 = vmul.f32 %v287, %v282
  %v291 = vmul.f32 %v287, %v283
  %v292 = vsel %vm286, 1, 0
  %vm293 = vcmp.eq.s32.totalorder %v292, 1
  %v294 = vsel %vm293, %v288, %v280
  %v295 = vsel %vm293, %v289, %v281
  %v296 = vsel %vm293, %v290, %v282
  %v297 = vsel %vm293, %v291, %v283
  %299 = vset.pattern.permute.xlu0 0
  %300 = vperm.xlu0 %299, %v60
  %v301 = vpop.permute.xlu0 %300
  %304 = vset.pattern.permute.xlu0 0
  %305 = vperm.xlu0 %304, %v61
  %v306 = vpop.permute.xlu0 %305
  %309 = vset.pattern.permute.xlu0 0
  %310 = vperm.xlu0 %309, %v62
  %v311 = vpop.permute.xlu0 %310
  %314 = vset.pattern.permute.xlu0 0
  %315 = vperm.xlu0 %314, %v63
  %v316 = vpop.permute.xlu0 %315
  %v318 = vadd.f32 %v294, %v301
  %v319 = vadd.f32 %v295, %v306
  %v320 = vadd.f32 %v296, %v311
  %v321 = vadd.f32 %v297, %v316
  %v322 = vmax.f32 %v318, 0.0
  %v323 = vmax.f32 %v319, 0.0
  %v324 = vmax.f32 %v320, 0.0
  %v325 = vmax.f32 %v321, 0.0
  %v326 = vld [vmem:[%s3] sm:$0xff]
  %v327 = vld [vmem:[%s4] sm:$0xff]
  %v328 = vmul.f32 %v322, %v322
  %v329 = vmul.f32 %v323, %v323
  %v330 = vmul.f32 %v324, %v324
  %v331 = vmul.f32 %v325, %v325
  %v332 = vsel %vm66, %v328, 0.0
  %v333 = vsel %vm66, %v329, 0.0
  %v334 = vadd.f32 %v332, %v333
  %v335 = vsel %vm66, %v330, 0.0
  %v336 = vadd.f32 %v334, %v335
  %v337 = vsel %vm66, %v331, 0.0
  %v338 = vadd.f32 %v336, %v337
  %v339 = vrot.slane %v338, 4
  %v340 = vadd.f32 %v338, %v339
  %v341 = vrot.slane %v340, 2
  %v342 = vadd.f32 %v340, %v341
  %v343 = vrot.slane %v342, 1
  %v344 = vadd.f32 %v342, %v343
  %v345 = vmax.f32 %v344, 1e-30
  %v346 = vrsqrt.pop %v345
  %v347 = vmul.f32 %v345, %v346
  %vm348 = vcmp.eq.f32.partialorder %v345, inf
  %v349 = vsel %vm348, %v345, %v347
  %vm350 = vcmp.eq.f32.partialorder %v345, 0.0
  %v351 = vand.u32 %v345, 2147483648
  %v352 = vsel %vm350, %v351, %v349
  %v353 = vrsqrt.pop %v345
  %v354 = vtanh.pop %v352
  %v355 = vmul.f32 %v354, %v353
  %v356 = vmul.f32 %v355, %v322
  %v357 = vmul.f32 %v355, %v323
  %v358 = vmul.f32 %v355, %v324
  %v359 = vmul.f32 %v355, %v325
  %v360 = vmax.f32 %v354, 1e-15
  %v361 = vrcp.pop %v360
  %vm362 = vcmp.gt.f32.partialorder %v360, 0.996
  %v363 = vmul.f32 %v361, 0.996
  %v364 = vmul.f32 %v363, %v356
  %v365 = vmul.f32 %v363, %v357
  %v366 = vmul.f32 %v363, %v358
  %v367 = vmul.f32 %v363, %v359
  %v368 = vsel %vm362, 1, 0
  %vm369 = vcmp.eq.s32.totalorder %v368, 1
  %v370 = vsel %vm369, %v364, %v356
  %v371 = vsel %vm369, %v365, %v357
  %v372 = vsel %vm369, %v366, %v358
  %v373 = vsel %vm369, %v367, %v359
  %v374 = vsel %vm362, 0.996, %v360
  %v375 = vsel %vm362, 1.004016, %v361
  %v377 = vsel %vm66, %v326, 0
  %379 = vmatprep.subr.mxu0 0.0
  %380 = vmatpush1.msra.mxu0 %v370
  %381 = vmatprep.subr.mxu0 0.0
  %382 = vmatpush1.msra.mxu0 %v371
  %383 = vmatprep.subr.mxu0 0.0
  %384 = vmatpush1.msra.mxu0 %v372
  %385 = vmatprep.subr.mxu0 0.0
  %386 = vmatpush1.msra.mxu0 %v373
  %387 = vmatprep.subr.mxu0 0.0
  %388 = vmatpush1.msra.mxu0 0.0
  %389 = vmatprep.subr.mxu0 0.0
  %390 = vmatpush1.msra.mxu0 0.0
  %391 = vmatprep.subr.mxu0 0.0
  %392 = vmatpush1.msra.mxu0 0.0
  %393 = vmatprep.subr.mxu0 0.0
  %394 = vmatpush1.msra.mxu0 0.0
  %395 = vmatprep.subr.mxu0 0.0
  %396 = vmatpush1.msra.mxu0 0.0
  %397 = vmatprep.subr.mxu0 0.0
  %398 = vmatpush1.msra.mxu0 0.0
  %399 = vmatprep.subr.mxu0 0.0
  %400 = vmatpush1.msra.mxu0 0.0
  %401 = vmatprep.subr.mxu0 0.0
  %402 = vmatpush1.msra.mxu0 0.0
  %403 = vmatprep.subr.mxu0 0.0
  %404 = vmatpush1.msra.mxu0 0.0
  %405 = vmatprep.subr.mxu0 0.0
  %406 = vmatpush1.msra.mxu0 0.0
  %407 = vmatprep.subr.mxu0 0.0
  %408 = vmatpush1.msra.mxu0 0.0
  %409 = vmatprep.subr.mxu0 0.0
  %410 = vmatpush1.msra.mxu0 0.0
  %411 = vmatprep.subr.mxu0 0.0
  %412 = vmatpush1.msra.mxu0 0.0
  %413 = vmatprep.subr.mxu0 0.0
  %414 = vmatpush1.msra.mxu0 0.0
  %415 = vmatprep.subr.mxu0 0.0
  %416 = vmatpush1.msra.mxu0 0.0
  %417 = vmatprep.subr.mxu0 0.0
  %418 = vmatpush1.msra.mxu0 0.0
  %419 = vmatprep.subr.mxu0 0.0
  %420 = vmatpush1.msra.mxu0 0.0
  %421 = vmatprep.subr.mxu0 0.0
  %422 = vmatpush1.msra.mxu0 0.0
  %423 = vmatprep.subr.mxu0 0.0
  %424 = vmatpush1.msra.mxu0 0.0
  %425 = vmatprep.subr.mxu0 0.0
  %426 = vmatpush1.msra.mxu0 0.0
  %427 = vmatprep.subr.mxu0 0.0
  %428 = vmatpush1.msra.mxu0 0.0
  %429 = vmatprep.subr.mxu0 0.0
  %430 = vmatpush1.msra.mxu0 0.0
  %431 = vmatprep.subr.mxu0 0.0
  %432 = vmatpush1.msra.mxu0 0.0
  %433 = vmatprep.subr.mxu0 0.0
  %434 = vmatpush1.msra.mxu0 0.0
  %435 = vmatprep.subr.mxu0 0.0
  %436 = vmatpush1.msra.mxu0 0.0
  %437 = vmatprep.subr.mxu0 0.0
  %438 = vmatpush1.msra.mxu0 0.0
  %439 = vmatprep.subr.mxu0 0.0
  %440 = vmatpush1.msra.mxu0 0.0
  %441 = vmatprep.subr.mxu0 0.0
  %442 = vmatpush1.msra.mxu0 0.0
  %443 = vmatprep.mubr.f32.mxu0 0.0
  %444 = vmatmul.mubr.f32.gmra.mrb[0].mxu0 %v377
  %v445 = vpop.f32.mrb[0].mxu0
  %v446 = vadd.f32 0.0, %v445
  %v447 = vpop.f32.mrb[0].mxu0
  %448 = vdwg.mxu0
  %v449 = vmul.f32 %v446, %v446
  %v450 = vsel %vm66, %v449, 0.0
  %v451 = vrot.slane %v450, 4
  %v452 = vadd.f32 %v450, %v451
  %v453 = vrot.slane %v452, 2
  %v454 = vadd.f32 %v452, %v453
  %v455 = vrot.slane %v454, 1
  %v456 = vadd.f32 %v454, %v455
  %v457 = vmax.f32 %v456, 1e-30
  %v458 = vrsqrt.pop %v457
  %v459 = vmul.f32 %v457, %v458
  %vm460 = vcmp.eq.f32.partialorder %v457, inf
  %v461 = vsel %vm460, %v457, %v459
  %vm462 = vcmp.eq.f32.partialorder %v457, 0.0
  %v463 = vand.u32 %v457, 2147483648
  %v464 = vsel %vm462, %v463, %v461
  %v465 = vrsqrt.pop %v457
  %v466 = vmul.f32 %v464, %v375
  %v467 = vadd.f32 %v374, 1.0
  %v468 = vlog2.pop %v467
  %v469 = vmul.f32 %v468, 0.6931472
  %v470 = vmul.f32 -0.5, %v374
  %v471 = vadd.f32 %v470, 1.0
  %v472 = vmul.f32 %v471, %v374
  %v473 = vand.u32 2147483647, %v374
  %vm474 = vcmp.lt.f32.partialorder %v473, 0.0004427343
  %v475 = vsel %vm474, %v472, %v469
  %v476 = vsub.f32 0.0, %v374
  %v477 = vadd.f32 %v476, 1.0
  %v478 = vlog2.pop %v477
  %v479 = vmul.f32 %v478, 0.6931472
  %v480 = vmul.f32 -0.5, %v476
  %v481 = vadd.f32 %v480, 1.0
  %v482 = vmul.f32 %v481, %v476
  %v483 = vand.u32 2147483647, %v476
  %vm484 = vcmp.lt.f32.partialorder %v483, 0.0004427343
  %v485 = vsel %vm484, %v482, %v479
  %v486 = vsub.f32 %v475, %v485
  %v487 = vmul.f32 %v486, 0.5
  %v488 = vmul.f32 %v466, %v487
  %v489 = vtanh.pop %v488
  %v490 = vmul.f32 %v489, %v465
  %v491 = vmul.f32 %v490, %v446
  %vm492 = vcmp.eq.f32.partialorder %v456, 0.0
  %v493 = vsel %vm492, 1, 0
  %vm494 = vcmp.eq.s32.totalorder %v493, 1
  %v495 = vsel %vm494, 0.0, %v491
  %v496 = vmax.f32 %v489, 1e-15
  %v497 = vsel %vm492, 1e-15, %v496
  %v498 = vrcp.pop %v497
  %vm499 = vcmp.gt.f32.partialorder %v497, 0.996
  %v500 = vmul.f32 %v498, 0.996
  %v501 = vmul.f32 %v500, %v495
  %v502 = vsel %vm499, 1, 0
  %vm503 = vcmp.eq.s32.totalorder %v502, 1
  %v504 = vsel %vm503, %v501, %v495
  %v505 = vsel %vm499, 0.996, %v497
  %v506 = vsel %vm499, 1.004016, %v498
  %v507 = vtanh.pop %v505
  %v508 = vmul.f32 %v507, %v506
  %v509 = vmul.f32 %v508, %v504
  %v510 = vmax.f32 %v507, 1e-15
  %v511 = vrcp.pop %v510
  %vm512 = vcmp.gt.f32.partialorder %v510, 0.996
  %v513 = vmul.f32 %v511, 0.996
  %v514 = vmul.f32 %v513, %v509
  %v515 = vsel %vm512, 1, 0
  %vm516 = vcmp.eq.s32.totalorder %v515, 1
  %v517 = vsel %vm516, %v514, %v509
  %519 = vset.pattern.permute.xlu0 0
  %520 = vperm.xlu0 %519, %v327
  %v521 = vpop.permute.xlu0 %520
  %v523 = vadd.f32 %v517, %v521
  %524 = vxpose.xlu0.b32.start [1/16] %v523, 128
  %525 = vxpose.xlu0.b32.cont [2/16] 0.0, 128
  %526 = vxpose.xlu0.b32.cont [3/16] 0.0, 128
  %527 = vxpose.xlu0.b32.cont [4/16] 0.0, 128
  %528 = vxpose.xlu0.b32.cont [5/16] 0.0, 128
  %529 = vxpose.xlu0.b32.cont [6/16] 0.0, 128
  %530 = vxpose.xlu0.b32.cont [7/16] 0.0, 128
  %531 = vxpose.xlu0.b32.cont [8/16] 0.0, 128
  %532 = vxpose.xlu0.b32.cont [9/16] 0.0, 128
  %533 = vxpose.xlu0.b32.cont [10/16] 0.0, 128
  %534 = vxpose.xlu0.b32.cont [11/16] 0.0, 128
  %535 = vxpose.xlu0.b32.cont [12/16] 0.0, 128
  %536 = vxpose.xlu0.b32.cont [13/16] 0.0, 128
  %537 = vxpose.xlu0.b32.cont [14/16] 0.0, 128
  %538 = vxpose.xlu0.b32.cont [15/16] 0.0, 128
  %539 = vxpose.xlu0.b32.end [16/16] 0.0, 128
  %v540 = vpop.trf.xlu0
  %v541 = vpop.trf.xlu0
  %v542 = vpop.trf.xlu0
  %v543 = vpop.trf.xlu0
  %v544 = vpop.trf.xlu0
  %v545 = vpop.trf.xlu0
  %v546 = vpop.trf.xlu0
  %v547 = vpop.trf.xlu0
  %v548 = vpop.trf.xlu0
  %v549 = vpop.trf.xlu0
  %v550 = vpop.trf.xlu0
  %v551 = vpop.trf.xlu0
  %v552 = vpop.trf.xlu0
  %v553 = vpop.trf.xlu0
  %v554 = vpop.trf.xlu0
  %v555 = vpop.trf.xlu0
  %vm556 = vcmask 64512
  %557 = vst.msk [vmem:[%s5] sm:$0xff] %vm556, %v540
  %558 = vst.msk [vmem:[%s5 + $0x8] sm:$0xff] %vm556, %v541
  %559 = vst.msk [vmem:[%s5 + $0x10] sm:$0xff] %vm556, %v542
  %560 = vst.msk [vmem:[%s5 + $0x18] sm:$0xff] %vm556, %v543
  // Predicated region
  $region22: #{tpu_custom_call.1} parent=0 // pred_check
    _
  $region23: #{tpu_custom_call.1} parent=0 // pred_check_branch
    %562 = sbr.rel (0) target = $region25
  $region24: #{tpu_custom_call.1} parent=0 // pred_region
    _
  $region25: #{tpu_custom_call.1} parent=0 // pred_fallthru
    _
  // Predicated region
  $region26: #{tpu_custom_call.1} parent=0 // pred_check
    _
  $region27: #{tpu_custom_call.1} parent=0 // pred_check_branch
    %564 = sbr.rel (0) target = $region29
  $region28: #{tpu_custom_call.1} parent=0 // pred_region
    _
  $region29: #{tpu_custom_call.1} parent=0 // pred_fallthru
    _

</llo_original>
